<compile_context>
chip_gen: v7x
topology: tpu7x:2x2x1
jax: 0.10.0
libtpu: 0.0.40
codegen_flags: <defaults>
</compile_context>

<pallas_src>
import jax
import jax.numpy as jnp
from jax.experimental import pallas as pl
from jax.experimental.pallas import tpu as pltpu


def rnn_kernel(x_ref, h0_ref, wih_ref, whh_ref, b_ref, wfc_ref, bfc_ref,
               out_ref, hid_ref, pre_scratch):
    # x_ref:   (seq*batch, hidden)   bf16  (time-major rows, batch contiguous)
    # h0_ref:  (batch, hidden)       f32
    # wih_ref: (hidden, hidden)      bf16  == weight_ih_l0.T
    # whh_ref: (hidden, hidden)      bf16  == weight_hh_l0.T
    # b_ref:   (1, hidden)           f32   == bias_ih_l0 + bias_hh_l0 (fused)
    # wfc_ref: (hidden, out_pad)     bf16  == fc.weight.T, zero-padded to 128 lanes
    # bfc_ref: (1, out_pad)          f32   pad columns hold a huge negative bias
    # out_ref: (batch, out_pad)      f32   log-probs (padded)
    # hid_ref: (batch, hidden)       f32   final hidden state
    # pre_scratch: VMEM (seq*batch, hidden) f32
    batch, hidden = h0_ref.shape
    seq = x_ref.shape[0] // batch

    # Hoisted input projection for ALL timesteps in a single MXU push, biases
    # folded in.  This work has no serial dependence on h, so it is completely
    # off the recurrence's critical path.
    pre_scratch[...] = (
        jnp.dot(x_ref[...], wih_ref[...], preferred_element_type=jnp.float32)
        + b_ref[...])

    w_hh = whh_ref[...]
    h = h0_ref[...]                                   # (batch, hidden) f32

    # Fully unrolled tanh-Elman recurrence (seq is static and small).
    for t in range(seq):
        pre_x = pre_scratch[pl.ds(t * batch, batch), :]
        h = jnp.tanh(pre_x + jnp.dot(h.astype(w_hh.dtype), w_hh,
                                     preferred_element_type=jnp.float32))

    hid_ref[...] = h.astype(hid_ref.dtype)            # == output[:, -1, :]

    # Last-step Linear + LogSoftmax (dim=1).  Padded output columns carry a
    # large-negative bias, so their exp() contribution is exactly 0 and the
    # log-softmax over the real columns is unchanged.
    logits = (jnp.dot(h.astype(wfc_ref.dtype), wfc_ref[...],
                      preferred_element_type=jnp.float32) + bfc_ref[...])
    m = jnp.max(logits, axis=-1, keepdims=True)
    lse = jnp.log(jnp.sum(jnp.exp(logits - m), axis=-1, keepdims=True)) + m
    out_ref[...] = (logits - lse).astype(out_ref.dtype)


def simple_rnn_forward(tokens, h0, params):
    # Embedding lookup (gather) kept as plain-JAX glue.
    # TODO(synk): in-kernel gather for the embedding table is not done here.
    batch, seq = tokens.shape
    hidden = params["embedding"].shape[1]
    out_size = params["b_fc"].shape[-1]

    # Reorder the tiny int32 token matrix (not the f32 embedded tensor) so the
    # gather lands directly in (seq, batch, hidden) layout, then flatten the
    # leading dims so the kernel sees clean 2-D tiles.
    x = params["embedding"][tokens.T]                 # (seq, batch, hidden) f32
    x = x.reshape(seq * batch, hidden).astype(jnp.bfloat16)

    # Fuse the two RNN biases once (removes two VPU adds per timestep).
    b_rnn = (params["b_ih"] + params["b_hh"]).astype(jnp.float32)

    # Pad the FC output to a full 128-lane tile for an unmasked, lane-dense
    # store; pad columns get a huge negative bias so log-softmax ignores them.
    out_pad = ((out_size + 127) // 128) * 128
    w_fc = jnp.pad(params["w_fc_t"], ((0, 0), (0, out_pad - out_size))
                   ).astype(jnp.bfloat16)
    b_fc = jnp.pad(params["b_fc"], ((0, 0), (0, out_pad - out_size)),
                   constant_values=-1e30).astype(jnp.float32)

    h0_2d = h0[0]                                     # num_layers == 1

    log_probs_pad, hidden_out = pl.pallas_call(
        rnn_kernel,
        out_shape=(
            jax.ShapeDtypeStruct((batch, out_pad), jnp.float32),
            jax.ShapeDtypeStruct((batch, hidden), jnp.float32),
        ),
        grid=(1,),
        in_specs=[
            pl.BlockSpec((seq * batch, hidden), lambda i: (0, 0)),
            pl.BlockSpec((batch, hidden), lambda i: (0, 0)),
            pl.BlockSpec((hidden, hidden), lambda i: (0, 0)),
            pl.BlockSpec((hidden, hidden), lambda i: (0, 0)),
            pl.BlockSpec((1, hidden), lambda i: (0, 0)),
            pl.BlockSpec((hidden, out_pad), lambda i: (0, 0)),
            pl.BlockSpec((1, out_pad), lambda i: (0, 0)),
        ],
        out_specs=(
            pl.BlockSpec((batch, out_pad), lambda i: (0, 0)),
            pl.BlockSpec((batch, hidden), lambda i: (0, 0)),
        ),
        scratch_shapes=[pltpu.VMEM((seq * batch, hidden), jnp.float32)],
        compiler_params=pltpu.CompilerParams(
            dimension_semantics=("arbitrary",)),
    )(x, h0_2d,
      params["w_ih_t"].astype(jnp.bfloat16),
      params["w_hh_t"].astype(jnp.bfloat16),
      b_rnn, w_fc, b_fc)

    log_probs = log_probs_pad[:, :out_size]
    hidden_out = hidden_out[None]                     # (1, batch, hidden)
    return log_probs, hidden_out


def init_params(key, vocab, hidden, out_size):
    ks = jax.random.split(key, 8)
    s = 1.0 / (hidden ** 0.5)
    u = lambda k, shape: jax.random.uniform(k, shape, jnp.float32, -s, s)
    return {
        "embedding": jax.random.normal(ks[0], (vocab, hidden), jnp.float32),
        "w_ih_t": u(ks[1], (hidden, hidden)),     # == weight_ih_l0.T
        "w_hh_t": u(ks[2], (hidden, hidden)),     # == weight_hh_l0.T
        "b_ih": u(ks[3], (1, hidden)),
        "b_hh": u(ks[4], (1, hidden)),
        "w_fc_t": u(ks[5], (hidden, out_size)),   # == fc.weight.T
        "b_fc": u(ks[6], (1, out_size)),
    }


if __name__ == "__main__":
    vocab = input_size = 32     # must equal hidden (see NOTE above)
    hidden = 32
    out_size = 16
    batch = 2
    seq = 8
    num_layers = 1

    key = jax.random.PRNGKey(0)
    pkey, tkey = jax.random.split(key)
    params = init_params(pkey, vocab, hidden, out_size)

    tokens = jax.random.randint(tkey, (batch, seq), 0, vocab, dtype=jnp.int32)
    h0 = jnp.zeros((num_layers, batch, hidden), jnp.float32)

    log_probs, hidden_out = simple_rnn_forward(tokens, h0, params)
    jax.block_until_ready((log_probs, hidden_out))

    assert log_probs.shape == (batch, out_size)
    assert hidden_out.shape == (num_layers, batch, hidden)
    assert bool(jnp.all(jnp.isfinite(log_probs)))
    print("KERNEL_OK")
</pallas_src>

<mosaic_0001>
module attributes {stable_mosaic.version = 11 : i64} {
  func.func @rnn_kernel(%arg0: i32, %arg1: memref<16x32xbf16, #tpu.memory_space<vmem>>, %arg2: memref<2x32xf32, #tpu.memory_space<vmem>>, %arg3: memref<32x32xbf16, #tpu.memory_space<vmem>>, %arg4: memref<32x32xbf16, #tpu.memory_space<vmem>>, %arg5: memref<1x32xf32, #tpu.memory_space<vmem>>, %arg6: memref<32x128xbf16, #tpu.memory_space<vmem>>, %arg7: memref<1x128xf32, #tpu.memory_space<vmem>>, %arg8: memref<2x128xf32, #tpu.memory_space<vmem>>, %arg9: memref<2x32xf32, #tpu.memory_space<vmem>>, %arg10: memref<16x32xf32, #tpu.memory_space<vmem>>) attributes {dimension_semantics = [#tpu.dimension_semantics<arbitrary>], iteration_bounds = array<i64: 1>, scalar_prefetch = 0 : i64, scratch_operands = 1 : i64, tpu.core_type = #tpu.core_type<tc>, window_params = [{pipeline_mode = #tpu.pipeline_mode<synchronous>, transform_indices = @transform_0, window_bounds = array<i64: 16, 32>}, {pipeline_mode = #tpu.pipeline_mode<synchronous>, transform_indices = @transform_1, window_bounds = array<i64: 2, 32>}, {pipeline_mode = #tpu.pipeline_mode<synchronous>, transform_indices = @transform_2, window_bounds = array<i64: 32, 32>}, {pipeline_mode = #tpu.pipeline_mode<synchronous>, transform_indices = @transform_3, window_bounds = array<i64: 32, 32>}, {pipeline_mode = #tpu.pipeline_mode<synchronous>, transform_indices = @transform_4, window_bounds = array<i64: 1, 32>}, {pipeline_mode = #tpu.pipeline_mode<synchronous>, transform_indices = @transform_5, window_bounds = array<i64: 32, 128>}, {pipeline_mode = #tpu.pipeline_mode<synchronous>, transform_indices = @transform_6, window_bounds = array<i64: 1, 128>}, {pipeline_mode = #tpu.pipeline_mode<synchronous>, transform_indices = @transform_7, window_bounds = array<i64: 2, 128>}, {pipeline_mode = #tpu.pipeline_mode<synchronous>, transform_indices = @transform_8, window_bounds = array<i64: 2, 32>}]} {
    %c0 = arith.constant 0 : index
    %c0_0 = arith.constant 0 : index
    %0 = vector.load %arg1[%c0, %c0_0] : memref<16x32xbf16, #tpu.memory_space<vmem>>, vector<16x32xbf16>
    %c0_1 = arith.constant 0 : index
    %c0_2 = arith.constant 0 : index
    %1 = vector.load %arg3[%c0_1, %c0_2] : memref<32x32xbf16, #tpu.memory_space<vmem>>, vector<32x32xbf16>
    %cst = arith.constant dense<0.000000e+00> : vector<16x32xf32>
    %2 = tpu.matmul %0, %1, %cst {dimension_numbers = #tpu.dot_dimension_numbers<[1], [0], [0], [1], [0, 0, 1, 1], [], []>} : vector<16x32xbf16>, vector<32x32xbf16>, vector<16x32xf32> -> vector<16x32xf32>
    %c0_3 = arith.constant 0 : index
    %c0_4 = arith.constant 0 : index
    %3 = vector.load %arg5[%c0_3, %c0_4] : memref<1x32xf32, #tpu.memory_space<vmem>>, vector<1x32xf32>
    %4 = vector.broadcast %3 : vector<1x32xf32> to vector<16x32xf32>
    %5 = arith.addf %2, %4 : vector<16x32xf32>
    %c0_5 = arith.constant 0 : index
    %c0_6 = arith.constant 0 : index
    %6 = vector.load %arg10[%c0_5, %c0_6] : memref<16x32xf32, #tpu.memory_space<vmem>>, vector<16x32xf32>
    tpu.vector_store %arg10[%c0_5, %c0_6], %5 {strides = array<i32>} : memref<16x32xf32, #tpu.memory_space<vmem>>, vector<16x32xf32>,
    %c0_7 = arith.constant 0 : index
    %c0_8 = arith.constant 0 : index
    %7 = vector.load %arg4[%c0_7, %c0_8] : memref<32x32xbf16, #tpu.memory_space<vmem>>, vector<32x32xbf16>
    %c0_9 = arith.constant 0 : index
    %c0_10 = arith.constant 0 : index
    %8 = vector.load %arg2[%c0_9, %c0_10] : memref<2x32xf32, #tpu.memory_space<vmem>>, vector<2x32xf32>
    %c0_11 = arith.constant 0 : index
    %c0_12 = arith.constant 0 : index
    %9 = vector.load %arg10[%c0_11, %c0_12] : memref<16x32xf32, #tpu.memory_space<vmem>>, vector<2x32xf32>
    %10 = arith.truncf %8 : vector<2x32xf32> to vector<2x32xbf16>
    %cst_13 = arith.constant dense<0.000000e+00> : vector<2x32xf32>
    %11 = tpu.matmul %10, %7, %cst_13 {dimension_numbers = #tpu.dot_dimension_numbers<[1], [0], [0], [1], [0, 0, 1, 1], [], []>} : vector<2x32xbf16>, vector<32x32xbf16>, vector<2x32xf32> -> vector<2x32xf32>
    %12 = arith.addf %9, %11 : vector<2x32xf32>
    %13 = math.tanh %12 : vector<2x32xf32>
    %c2 = arith.constant 2 : index
    %c0_14 = arith.constant 0 : index
    %14 = vector.load %arg10[%c2, %c0_14] : memref<16x32xf32, #tpu.memory_space<vmem>>, vector<2x32xf32>
    %15 = arith.truncf %13 : vector<2x32xf32> to vector<2x32xbf16>
    %cst_15 = arith.constant dense<0.000000e+00> : vector<2x32xf32>
    %16 = tpu.matmul %15, %7, %cst_15 {dimension_numbers = #tpu.dot_dimension_numbers<[1], [0], [0], [1], [0, 0, 1, 1], [], []>} : vector<2x32xbf16>, vector<32x32xbf16>, vector<2x32xf32> -> vector<2x32xf32>
    %17 = arith.addf %14, %16 : vector<2x32xf32>
    %18 = math.tanh %17 : vector<2x32xf32>
    %c4 = arith.constant 4 : index
    %c0_16 = arith.constant 0 : index
    %19 = vector.load %arg10[%c4, %c0_16] : memref<16x32xf32, #tpu.memory_space<vmem>>, vector<2x32xf32>
    %20 = arith.truncf %18 : vector<2x32xf32> to vector<2x32xbf16>
    %cst_17 = arith.constant dense<0.000000e+00> : vector<2x32xf32>
    %21 = tpu.matmul %20, %7, %cst_17 {dimension_numbers = #tpu.dot_dimension_numbers<[1], [0], [0], [1], [0, 0, 1, 1], [], []>} : vector<2x32xbf16>, vector<32x32xbf16>, vector<2x32xf32> -> vector<2x32xf32>
    %22 = arith.addf %19, %21 : vector<2x32xf32>
    %23 = math.tanh %22 : vector<2x32xf32>
    %c6 = arith.constant 6 : index
    %c0_18 = arith.constant 0 : index
    %24 = vector.load %arg10[%c6, %c0_18] : memref<16x32xf32, #tpu.memory_space<vmem>>, vector<2x32xf32>
    %25 = arith.truncf %23 : vector<2x32xf32> to vector<2x32xbf16>
    %cst_19 = arith.constant dense<0.000000e+00> : vector<2x32xf32>
    %26 = tpu.matmul %25, %7, %cst_19 {dimension_numbers = #tpu.dot_dimension_numbers<[1], [0], [0], [1], [0, 0, 1, 1], [], []>} : vector<2x32xbf16>, vector<32x32xbf16>, vector<2x32xf32> -> vector<2x32xf32>
    %27 = arith.addf %24, %26 : vector<2x32xf32>
    %28 = math.tanh %27 : vector<2x32xf32>
    %c8 = arith.constant 8 : index
    %c0_20 = arith.constant 0 : index
    %29 = vector.load %arg10[%c8, %c0_20] : memref<16x32xf32, #tpu.memory_space<vmem>>, vector<2x32xf32>
    %30 = arith.truncf %28 : vector<2x32xf32> to vector<2x32xbf16>
    %cst_21 = arith.constant dense<0.000000e+00> : vector<2x32xf32>
    %31 = tpu.matmul %30, %7, %cst_21 {dimension_numbers = #tpu.dot_dimension_numbers<[1], [0], [0], [1], [0, 0, 1, 1], [], []>} : vector<2x32xbf16>, vector<32x32xbf16>, vector<2x32xf32> -> vector<2x32xf32>
    %32 = arith.addf %29, %31 : vector<2x32xf32>
    %33 = math.tanh %32 : vector<2x32xf32>
    %c10 = arith.constant 10 : index
    %c0_22 = arith.constant 0 : index
    %34 = vector.load %arg10[%c10, %c0_22] : memref<16x32xf32, #tpu.memory_space<vmem>>, vector<2x32xf32>
    %35 = arith.truncf %33 : vector<2x32xf32> to vector<2x32xbf16>
    %cst_23 = arith.constant dense<0.000000e+00> : vector<2x32xf32>
    %36 = tpu.matmul %35, %7, %cst_23 {dimension_numbers = #tpu.dot_dimension_numbers<[1], [0], [0], [1], [0, 0, 1, 1], [], []>} : vector<2x32xbf16>, vector<32x32xbf16>, vector<2x32xf32> -> vector<2x32xf32>
    %37 = arith.addf %34, %36 : vector<2x32xf32>
    %38 = math.tanh %37 : vector<2x32xf32>
    %c12 = arith.constant 12 : index
    %c0_24 = arith.constant 0 : index
    %39 = vector.load %arg10[%c12, %c0_24] : memref<16x32xf32, #tpu.memory_space<vmem>>, vector<2x32xf32>
    %40 = arith.truncf %38 : vector<2x32xf32> to vector<2x32xbf16>
    %cst_25 = arith.constant dense<0.000000e+00> : vector<2x32xf32>
    %41 = tpu.matmul %40, %7, %cst_25 {dimension_numbers = #tpu.dot_dimension_numbers<[1], [0], [0], [1], [0, 0, 1, 1], [], []>} : vector<2x32xbf16>, vector<32x32xbf16>, vector<2x32xf32> -> vector<2x32xf32>
    %42 = arith.addf %39, %41 : vector<2x32xf32>
    %43 = math.tanh %42 : vector<2x32xf32>
    %c14 = arith.constant 14 : index
    %c0_26 = arith.constant 0 : index
    %44 = vector.load %arg10[%c14, %c0_26] : memref<16x32xf32, #tpu.memory_space<vmem>>, vector<2x32xf32>
    %45 = arith.truncf %43 : vector<2x32xf32> to vector<2x32xbf16>
    %cst_27 = arith.constant dense<0.000000e+00> : vector<2x32xf32>
    %46 = tpu.matmul %45, %7, %cst_27 {dimension_numbers = #tpu.dot_dimension_numbers<[1], [0], [0], [1], [0, 0, 1, 1], [], []>} : vector<2x32xbf16>, vector<32x32xbf16>, vector<2x32xf32> -> vector<2x32xf32>
    %47 = arith.addf %44, %46 : vector<2x32xf32>
    %48 = math.tanh %47 : vector<2x32xf32>
    %c0_28 = arith.constant 0 : index
    %c0_29 = arith.constant 0 : index
    %49 = vector.load %arg9[%c0_28, %c0_29] : memref<2x32xf32, #tpu.memory_space<vmem>>, vector<2x32xf32>
    tpu.vector_store %arg9[%c0_28, %c0_29], %48 {strides = array<i32>} : memref<2x32xf32, #tpu.memory_space<vmem>>, vector<2x32xf32>,
    %50 = arith.truncf %48 : vector<2x32xf32> to vector<2x32xbf16>
    %c0_30 = arith.constant 0 : index
    %c0_31 = arith.constant 0 : index
    %51 = vector.load %arg6[%c0_30, %c0_31] : memref<32x128xbf16, #tpu.memory_space<vmem>>, vector<32x128xbf16>
    %cst_32 = arith.constant dense<0.000000e+00> : vector<2x128xf32>
    %52 = tpu.matmul %50, %51, %cst_32 {dimension_numbers = #tpu.dot_dimension_numbers<[1], [0], [0], [1], [0, 0, 1, 1], [], []>} : vector<2x32xbf16>, vector<32x128xbf16>, vector<2x128xf32> -> vector<2x128xf32>
    %c0_33 = arith.constant 0 : index
    %c0_34 = arith.constant 0 : index
    %53 = vector.load %arg7[%c0_33, %c0_34] : memref<1x128xf32, #tpu.memory_space<vmem>>, vector<1x128xf32>
    %54 = vector.broadcast %53 : vector<1x128xf32> to vector<2x128xf32>
    %55 = arith.addf %52, %54 : vector<2x128xf32>
    %cst_35 = arith.constant dense<0xFF800000> : vector<2xf32>
    %56 = vector.multi_reduction <maximumf>, %55, %cst_35 [1] : vector<2x128xf32> to vector<2xf32>
    %57 = vector.shape_cast %56 : vector<2xf32> to vector<2x1xf32>
    %58 = vector.broadcast %57 : vector<2x1xf32> to vector<2x128xf32>
    %59 = arith.subf %55, %58 : vector<2x128xf32>
    %60 = math.exp %59 : vector<2x128xf32>
    %cst_36 = arith.constant dense<0.000000e+00> : vector<2xf32>
    %61 = vector.multi_reduction <add>, %60, %cst_36 [1] : vector<2x128xf32> to vector<2xf32>
    %62 = vector.shape_cast %61 : vector<2xf32> to vector<2x1xf32>
    %63 = math.log %62 : vector<2x1xf32>
    %64 = arith.addf %63, %57 : vector<2x1xf32>
    %65 = vector.broadcast %64 : vector<2x1xf32> to vector<2x128xf32>
    %66 = arith.subf %55, %65 : vector<2x128xf32>
    %c0_37 = arith.constant 0 : index
    %c0_38 = arith.constant 0 : index
    %67 = vector.load %arg8[%c0_37, %c0_38] : memref<2x128xf32, #tpu.memory_space<vmem>>, vector<2x128xf32>
    tpu.vector_store %arg8[%c0_37, %c0_38], %66 {strides = array<i32>} : memref<2x128xf32, #tpu.memory_space<vmem>>, vector<2x128xf32>,
    return
  }
  func.func @transform_0(%arg0: i32) -> (i32, i32) {
    %c0_i32 = arith.constant 0 : i32
    %c0_i32_0 = arith.constant 0 : i32
    %c0_i32_1 = arith.constant 0 : i32
    return %c0_i32, %c0_i32_0 : i32, i32
  }
  func.func @transform_1(%arg0: i32) -> (i32, i32) {
    %c0_i32 = arith.constant 0 : i32
    %c0_i32_0 = arith.constant 0 : i32
    %c0_i32_1 = arith.constant 0 : i32
    return %c0_i32, %c0_i32_0 : i32, i32
  }
  func.func @transform_2(%arg0: i32) -> (i32, i32) {
    %c0_i32 = arith.constant 0 : i32
    %c0_i32_0 = arith.constant 0 : i32
    %c0_i32_1 = arith.constant 0 : i32
    return %c0_i32, %c0_i32_0 : i32, i32
  }
  func.func @transform_3(%arg0: i32) -> (i32, i32) {
    %c0_i32 = arith.constant 0 : i32
    %c0_i32_0 = arith.constant 0 : i32
    %c0_i32_1 = arith.constant 0 : i32
    return %c0_i32, %c0_i32_0 : i32, i32
  }
  func.func @transform_4(%arg0: i32) -> (i32, i32) {
    %c0_i32 = arith.constant 0 : i32
    %c0_i32_0 = arith.constant 0 : i32
    %c0_i32_1 = arith.constant 0 : i32
    return %c0_i32, %c0_i32_0 : i32, i32
  }
  func.func @transform_5(%arg0: i32) -> (i32, i32) {
    %c0_i32 = arith.constant 0 : i32
    %c0_i32_0 = arith.constant 0 : i32
    %c0_i32_1 = arith.constant 0 : i32
    return %c0_i32, %c0_i32_0 : i32, i32
  }
  func.func @transform_6(%arg0: i32) -> (i32, i32) {
    %c0_i32 = arith.constant 0 : i32
    %c0_i32_0 = arith.constant 0 : i32
    %c0_i32_1 = arith.constant 0 : i32
    return %c0_i32, %c0_i32_0 : i32, i32
  }
  func.func @transform_7(%arg0: i32) -> (i32, i32) {
    %c0_i32 = arith.constant 0 : i32
    %c0_i32_0 = arith.constant 0 : i32
    %c0_i32_1 = arith.constant 0 : i32
    return %c0_i32, %c0_i32_0 : i32, i32
  }
  func.func @transform_8(%arg0: i32) -> (i32, i32) {
    %c0_i32 = arith.constant 0 : i32
    %c0_i32_0 = arith.constant 0 : i32
    %c0_i32_1 = arith.constant 0 : i32
    return %c0_i32, %c0_i32_0 : i32, i32
  }
}

</mosaic_0001>

<llo_original>
// kernel: tpu_custom_call.1
$region0: #{tpu_custom_call.1}
  #allocation0 [shape = 'u32[]', space=smem, size = 0x4, offset = 0x4, fixed_abs, tag = 'smem constant byte address 0x4 - core index']
  #allocation1 [shape = 'u32[144,128]{1,0:T(1,128)}', space=vmem, size = 0x12000, scoped, tag = 'internal scratch']
  #allocation2 [shape = 'f32[16,32]{1,0:T(8,128)}', space=vmem, size = 0x2000, scoped, tag = 'scratch operand']
  %s0 = inlined_call_operand.hbm [shape: bf16[16,32], index: 0, kind: input, shape index: {}]
  %s1 = inlined_call_operand.vmem [shape: f32[2,32], index: 1, kind: input, shape index: {}]
  %s2 = inlined_call_operand.hbm [shape: bf16[32,32], index: 2, kind: input, shape index: {}]
  %s3 = inlined_call_operand.hbm [shape: bf16[32,32], index: 3, kind: input, shape index: {}]
  %s4 = inlined_call_operand.hbm [shape: f32[1,32], index: 4, kind: input, shape index: {}]
  %s5 = inlined_call_operand.vmem [shape: bf16[32,128], index: 5, kind: input, shape index: {}]
  %s6 = inlined_call_operand.vmem [shape: f32[1,128], index: 6, kind: input, shape index: {}]
  %s7 = inlined_call_operand.hbm [shape: f32[2,128], index: 7, kind: output, shape index: {0}]
  %s8 = inlined_call_operand.hbm [shape: f32[2,32], index: 8, kind: output, shape index: {1}]
  %9 = xla_tuple %s7, %s8
  %s10 = sld [smem:[#allocation0]]
  $region62: #{tpu_custom_call.1} parent=0
    _
  %s12 = ssub.s32 1, %s10
  %s13 = scalar_select 0, %s12, %s10
  $region1: #{tpu_custom_call.1} parent=0
    #allocation3 [shape = 'u8[4096]{0}', space=vmem, size = 0x1000, scoped, tag = 'input window, operand 0, single buffered']
    #allocation4 [shape = 's32[1]{0}', space=sflag, size = 0x4, scoped, tag = 'scoped memory for tpu_custom_call.1']
    #allocation5 [shape = 's32[1]{0}', space=sflag, size = 0x4, scoped, tag = 'scoped memory for tpu_custom_call.1']
    #allocation6 [shape = 'u8[8192]{0}', space=vmem, size = 0x2000, scoped, tag = 'input window, operand 2, single buffered']
    #allocation7 [shape = 's32[1]{0}', space=sflag, size = 0x4, scoped, tag = 'scoped memory for tpu_custom_call.1']
    #allocation8 [shape = 'u8[8192]{0}', space=vmem, size = 0x2000, scoped, tag = 'input window, operand 3, single buffered']
    #allocation9 [shape = 'u8[512]{0}', space=vmem, size = 0x400, scoped, tag = 'input window, operand 4, single buffered']
    #allocation10 [shape = 's32[1]{0}', space=sflag, size = 0x4, scoped, tag = 'scoped memory for tpu_custom_call.1']
    #allocation11 [shape = 'u8[1024]{0}', space=vmem, size = 0x400, scoped, tag = 'output window, operand 0, single buffered']
    #allocation12 [shape = 'u8[1024]{0}', space=vmem, size = 0x400, scoped, tag = 'output window, operand 1, single buffered']
    #allocation13 [shape = 's32[1]{0}', space=sflag, size = 0x4, scoped, tag = 'scoped memory for tpu_custom_call.1']
    %14 = vsyncpa [#allocation4], 0
    %15 = vsyncpa [#allocation7], 0
    %16 = vsyncpa [#allocation10], 0
    %17 = vsyncpa [#allocation5], 0
    %18 = vsyncpa [#allocation13], 0
    // Predicated region
    $region2: #{tpu_custom_call.1} parent=1 // pred_check
      _
    $region3: #{tpu_custom_call.1} parent=1 // pred_check_branch
      %20 = sbr.rel (0) target = $region5
    $region4: #{tpu_custom_call.1} parent=1 // pred_region
      %s22 = ssub.s32 128, 128
      %23 = vsyncadd [#allocation4], %s22
      %s24 = sshll.u32 [#allocation3], 4
      %s25 = int_to_ptr.vmem [resolvable:$true] %s24
      %30 = dma.hbm_to_vmem [thread:$0]  %s0, 128, %s25, [#allocation4], 64, 64, 4
    $region5: #{tpu_custom_call.1} parent=1 // pred_fallthru
      _
    // Predicated region
    $region6: #{tpu_custom_call.1} parent=1 // pred_check
      _
    $region7: #{tpu_custom_call.1} parent=1 // pred_check_branch
      %32 = sbr.rel (0) target = $region9
    $region8: #{tpu_custom_call.1} parent=1 // pred_region
      _
    $region9: #{tpu_custom_call.1} parent=1 // pred_fallthru
      _
    // Predicated region
    $region10: #{tpu_custom_call.1} parent=1 // pred_check
      _
    $region11: #{tpu_custom_call.1} parent=1 // pred_check_branch
      %34 = sbr.rel (0) target = $region13
    $region12: #{tpu_custom_call.1} parent=1 // pred_region
      %s36 = ssub.s32 256, 256
      %37 = vsyncadd [#allocation7], %s36
      %s38 = sshll.u32 [#allocation6], 4
      %s39 = int_to_ptr.vmem [resolvable:$true] %s38
      %44 = dma.hbm_to_vmem [thread:$0]  %s2, 256, %s39, [#allocation7], 64, 64, 4
    $region13: #{tpu_custom_call.1} parent=1 // pred_fallthru
      _
    // Predicated region
    $region14: #{tpu_custom_call.1} parent=1 // pred_check
      _
    $region15: #{tpu_custom_call.1} parent=1 // pred_check_branch
      %46 = sbr.rel (0) target = $region17
    $region16: #{tpu_custom_call.1} parent=1 // pred_region
      %s48 = ssub.s32 256, 256
      %49 = vsyncadd [#allocation7], %s48
      %s50 = sshll.u32 [#allocation8], 4
      %s51 = int_to_ptr.vmem [resolvable:$true] %s50
      %56 = dma.hbm_to_vmem [thread:$0]  %s3, 256, %s51, [#allocation7], 64, 64, 4
    $region17: #{tpu_custom_call.1} parent=1 // pred_fallthru
      _
    // Predicated region
    $region18: #{tpu_custom_call.1} parent=1 // pred_check
      _
    $region19: #{tpu_custom_call.1} parent=1 // pred_check_branch
      %58 = sbr.rel (0) target = $region21
    $region20: #{tpu_custom_call.1} parent=1 // pred_region
      %s60 = ssub.s32 16, 16
      %61 = vsyncadd [#allocation10], %s60
      %s63 = sshll.u32 [#allocation9], 4
      %s64 = int_to_ptr.vmem [resolvable:$true] %s63
      %66 = dma.hbm_to_vmem [thread:$0]  %s4, 16, %s64, [#allocation10]
    $region21: #{tpu_custom_call.1} parent=1 // pred_fallthru
      _
    // Predicated region
    $region22: #{tpu_custom_call.1} parent=1 // pred_check
      _
    $region23: #{tpu_custom_call.1} parent=1 // pred_check_branch
      %68 = sbr.rel (0) target = $region25
    $region24: #{tpu_custom_call.1} parent=1 // pred_region
      _
    $region25: #{tpu_custom_call.1} parent=1 // pred_fallthru
      _
    // Predicated region
    $region26: #{tpu_custom_call.1} parent=1 // pred_check
      _
    $region27: #{tpu_custom_call.1} parent=1 // pred_check_branch
      %70 = sbr.rel (0) target = $region29
    $region28: #{tpu_custom_call.1} parent=1 // pred_region
      _
    $region29: #{tpu_custom_call.1} parent=1 // pred_fallthru
      _
    // Predicated region
    $region30: #{tpu_custom_call.1} parent=1 // pred_check
      _
    $region31: #{tpu_custom_call.1} parent=1 // pred_check_branch
      %72 = sbr.rel (0) target = $region33
    $region32: #{tpu_custom_call.1} parent=1 // pred_region
      %73 = dma.done [#allocation4], 128
    $region33: #{tpu_custom_call.1} parent=1 // pred_fallthru
      _
    // Predicated region
    $region34: #{tpu_custom_call.1} parent=1 // pred_check
      _
    $region35: #{tpu_custom_call.1} parent=1 // pred_check_branch
      %75 = sbr.rel (0) target = $region37
    $region36: #{tpu_custom_call.1} parent=1 // pred_region
      %76 = dma.done [#allocation7], 256
    $region37: #{tpu_custom_call.1} parent=1 // pred_fallthru
      _
    // Predicated region
    $region38: #{tpu_custom_call.1} parent=1 // pred_check
      _
    $region39: #{tpu_custom_call.1} parent=1 // pred_check_branch
      %78 = sbr.rel (0) target = $region41
    $region40: #{tpu_custom_call.1} parent=1 // pred_region
      %79 = dma.done [#allocation7], 256
    $region41: #{tpu_custom_call.1} parent=1 // pred_fallthru
      _
    // Predicated region
    $region42: #{tpu_custom_call.1} parent=1 // pred_check
      _
    $region43: #{tpu_custom_call.1} parent=1 // pred_check_branch
      %81 = sbr.rel (0) target = $region45
    $region44: #{tpu_custom_call.1} parent=1 // pred_region
      %82 = dma.done [#allocation10], 16
    $region45: #{tpu_custom_call.1} parent=1 // pred_fallthru
      _
    %v84 = vld [vmem:[#allocation3] sm:$0xf]
    %v85 = vld [vmem:[#allocation3 + $0x4] sm:$0xf]
    %v86 = vld [vmem:[#allocation6] sm:$0xf]
    %v87 = vld [vmem:[#allocation6 + $0x4] sm:$0xf]
    %v88 = vld [vmem:[#allocation6 + $0x8] sm:$0xf]
    %v89 = vld [vmem:[#allocation6 + $0xc] sm:$0xf]
    %v90 = vld [vmem:[#allocation9] sm:$0x1]
    %v92 = vlaneseq
    %v93 = vshrl.u32 %v92, 7
    %v94 = vsub.s32 0, %v93
    %v95 = vrot.slane %v90, %v94
    %v99 = vunpack.c.l.b16 %v84
    %v100 = vunpack.c.l.b16 %v85
    %v101 = vpack.c.b16 %v100, %v99
    %v106 = vunpack.c.l.b16 %v86
    %v107 = vunpack.c.l.b16 %v87
    %v108 = vunpack.c.l.b16 %v88
    %v109 = vunpack.c.l.b16 %v89
    %v110 = vpack.c.b16 %v107, %v106
    %v111 = vpack.c.b16 %v109, %v108
    %vm114 = vcmask 261120
    %v116 = vsel %vm114, %v101, 0
    %118 = vmatprep.subr.bf16.mxu0 0
    %119 = vmatpush1.bf16.msra.mxu0 %v110
    %120 = vmatprep.subr.bf16.mxu0 0
    %121 = vmatpush1.bf16.msra.mxu0 %v111
    %122 = vmatprep.subr.bf16.mxu0 0
    %123 = vmatpush1.bf16.msra.mxu0 0
    %124 = vmatprep.subr.bf16.mxu0 0
    %125 = vmatpush1.bf16.msra.mxu0 0
    %126 = vmatprep.subr.bf16.mxu0 0
    %127 = vmatpush1.bf16.msra.mxu0 0
    %128 = vmatprep.subr.bf16.mxu0 0
    %129 = vmatpush1.bf16.msra.mxu0 0
    %130 = vmatprep.subr.bf16.mxu0 0
    %131 = vmatpush1.bf16.msra.mxu0 0
    %132 = vmatprep.subr.bf16.mxu0 0
    %133 = vmatpush1.bf16.msra.mxu0 0
    %134 = vmatprep.subr.bf16.mxu0 0
    %135 = vmatpush1.bf16.msra.mxu0 0
    %136 = vmatprep.subr.bf16.mxu0 0
    %137 = vmatpush1.bf16.msra.mxu0 0
    %138 = vmatprep.subr.bf16.mxu0 0
    %139 = vmatpush1.bf16.msra.mxu0 0
    %140 = vmatprep.subr.bf16.mxu0 0
    %141 = vmatpush1.bf16.msra.mxu0 0
    %142 = vmatprep.subr.bf16.mxu0 0
    %143 = vmatpush1.bf16.msra.mxu0 0
    %144 = vmatprep.subr.bf16.mxu0 0
    %145 = vmatpush1.bf16.msra.mxu0 0
    %146 = vmatprep.subr.bf16.mxu0 0
    %147 = vmatpush1.bf16.msra.mxu0 0
    %148 = vmatprep.subr.bf16.mxu0 0
    %149 = vmatpush1.bf16.msra.mxu0 0
    %150 = vmatprep.mubr.bf16.mxu0 0
    %151 = vmatmul.mubr.bf16.gmra.mrb[0].mxu0 %v116
    %v152 = vpop.f32.mrb[0].mxu0
    %v153 = vadd.f32 %v95, %v152
    %v154 = vpop.f32.mrb[0].mxu0
    %v155 = vpop.f32.mrb[0].mxu0
    %v156 = vadd.f32 %v95, %v155
    %v157 = vpop.f32.mrb[0].mxu0
    %158 = vdwg.mxu0
    %159 = vst.msk [vmem:[#allocation2] sm:$0xff] %vm114, %v153
    %160 = vst.msk [vmem:[#allocation2 + $0x8] sm:$0xff] %vm114, %v156
    %v161 = vld [vmem:[#allocation8] sm:$0xf]
    %v162 = vld [vmem:[#allocation8 + $0x4] sm:$0xf]
    %v163 = vld [vmem:[#allocation8 + $0x8] sm:$0xf]
    %v164 = vld [vmem:[#allocation8 + $0xc] sm:$0xf]
    %v165 = vld [vmem:[%s1] sm:$0x3]
    %v166 = vld [vmem:[#allocation2] sm:$0x3]
    %v167 = vpack.c.bf16 %v165, %v165
    %v172 = vunpack.c.l.b16 %v161
    %v173 = vunpack.c.l.b16 %v162
    %v174 = vunpack.c.l.b16 %v163
    %v175 = vunpack.c.l.b16 %v164
    %v176 = vpack.c.b16 %v173, %v172
    %v177 = vpack.c.b16 %v175, %v174
    %v181 = vsel %vm114, %v167, 0
    %183 = vmatprep.subr.bf16.mxu0 0
    %184 = vmatpush1.bf16.msra.mxu0 %v176
    %185 = vmatprep.subr.bf16.mxu0 0
    %186 = vmatpush1.bf16.msra.mxu0 %v177
    %187 = vmatprep.subr.bf16.mxu0 0
    %188 = vmatpush1.bf16.msra.mxu0 0
    %189 = vmatprep.subr.bf16.mxu0 0
    %190 = vmatpush1.bf16.msra.mxu0 0
    %191 = vmatprep.subr.bf16.mxu0 0
    %192 = vmatpush1.bf16.msra.mxu0 0
    %193 = vmatprep.subr.bf16.mxu0 0
    %194 = vmatpush1.bf16.msra.mxu0 0
    %195 = vmatprep.subr.bf16.mxu0 0
    %196 = vmatpush1.bf16.msra.mxu0 0
    %197 = vmatprep.subr.bf16.mxu0 0
    %198 = vmatpush1.bf16.msra.mxu0 0
    %199 = vmatprep.subr.bf16.mxu0 0
    %200 = vmatpush1.bf16.msra.mxu0 0
    %201 = vmatprep.subr.bf16.mxu0 0
    %202 = vmatpush1.bf16.msra.mxu0 0
    %203 = vmatprep.subr.bf16.mxu0 0
    %204 = vmatpush1.bf16.msra.mxu0 0
    %205 = vmatprep.subr.bf16.mxu0 0
    %206 = vmatpush1.bf16.msra.mxu0 0
    %207 = vmatprep.subr.bf16.mxu0 0
    %208 = vmatpush1.bf16.msra.mxu0 0
    %209 = vmatprep.subr.bf16.mxu0 0
    %210 = vmatpush1.bf16.msra.mxu0 0
    %211 = vmatprep.subr.bf16.mxu0 0
    %212 = vmatpush1.bf16.msra.mxu0 0
    %213 = vmatprep.subr.bf16.mxu0 0
    %214 = vmatpush1.bf16.msra.mxu0 0
    %215 = vmatprep.mubr.bf16.mxu0 0
    %216 = vmatmul.mubr.bf16.gmra.mrb[0].mxu0 %v181
    %v217 = vpop.f32.mrb[0].mxu0
    %v218 = vadd.f32 0.0, %v217
    %v219 = vpop.f32.mrb[0].mxu0
    %v220 = vpop.f32.mrb[0].mxu0
    %v221 = vpop.f32.mrb[0].mxu0
    %222 = vdwg.mxu0
    %v223 = vadd.f32 %v166, %v218
    %v224 = vtanh.pop %v223
    %v225 = vld [vmem:[#allocation2 + $0x2] sm:$0x3]
    %v226 = vpack.c.bf16 %v224, %v224
    %v228 = vsel %vm114, %v226, 0
    %230 = vmatprep.subr.bf16.mxu0 0
    %231 = vmatpush1.bf16.msra.mxu0 %v176
    %232 = vmatprep.subr.bf16.mxu0 0
    %233 = vmatpush1.bf16.msra.mxu0 %v177
    %234 = vmatprep.subr.bf16.mxu0 0
    %235 = vmatpush1.bf16.msra.mxu0 0
    %236 = vmatprep.subr.bf16.mxu0 0
    %237 = vmatpush1.bf16.msra.mxu0 0
    %238 = vmatprep.subr.bf16.mxu0 0
    %239 = vmatpush1.bf16.msra.mxu0 0
    %240 = vmatprep.subr.bf16.mxu0 0
    %241 = vmatpush1.bf16.msra.mxu0 0
    %242 = vmatprep.subr.bf16.mxu0 0
    %243 = vmatpush1.bf16.msra.mxu0 0
    %244 = vmatprep.subr.bf16.mxu0 0
    %245 = vmatpush1.bf16.msra.mxu0 0
    %246 = vmatprep.subr.bf16.mxu0 0
    %247 = vmatpush1.bf16.msra.mxu0 0
    %248 = vmatprep.subr.bf16.mxu0 0
    %249 = vmatpush1.bf16.msra.mxu0 0
    %250 = vmatprep.subr.bf16.mxu0 0
    %251 = vmatpush1.bf16.msra.mxu0 0
    %252 = vmatprep.subr.bf16.mxu0 0
    %253 = vmatpush1.bf16.msra.mxu0 0
    %254 = vmatprep.subr.bf16.mxu0 0
    %255 = vmatpush1.bf16.msra.mxu0 0
    %256 = vmatprep.subr.bf16.mxu0 0
    %257 = vmatpush1.bf16.msra.mxu0 0
    %258 = vmatprep.subr.bf16.mxu0 0
    %259 = vmatpush1.bf16.msra.mxu0 0
    %260 = vmatprep.subr.bf16.mxu0 0
    %261 = vmatpush1.bf16.msra.mxu0 0
    %262 = vmatprep.mubr.bf16.mxu0 0
    %263 = vmatmul.mubr.bf16.gmra.mrb[0].mxu0 %v228
    %v264 = vpop.f32.mrb[0].mxu0
    %v265 = vadd.f32 0.0, %v264
    %v266 = vpop.f32.mrb[0].mxu0
    %v267 = vpop.f32.mrb[0].mxu0
    %v268 = vpop.f32.mrb[0].mxu0
    %269 = vdwg.mxu0
    %v270 = vadd.f32 %v225, %v265
    %v271 = vtanh.pop %v270
    %v272 = vld [vmem:[#allocation2 + $0x4] sm:$0x3]
    %v273 = vpack.c.bf16 %v271, %v271
    %v275 = vsel %vm114, %v273, 0
    %277 = vmatprep.subr.bf16.mxu0 0
    %278 = vmatpush1.bf16.msra.mxu0 %v176
    %279 = vmatprep.subr.bf16.mxu0 0
    %280 = vmatpush1.bf16.msra.mxu0 %v177
    %281 = vmatprep.subr.bf16.mxu0 0
    %282 = vmatpush1.bf16.msra.mxu0 0
    %283 = vmatprep.subr.bf16.mxu0 0
    %284 = vmatpush1.bf16.msra.mxu0 0
    %285 = vmatprep.subr.bf16.mxu0 0
    %286 = vmatpush1.bf16.msra.mxu0 0
    %287 = vmatprep.subr.bf16.mxu0 0
    %288 = vmatpush1.bf16.msra.mxu0 0
    %289 = vmatprep.subr.bf16.mxu0 0
    %290 = vmatpush1.bf16.msra.mxu0 0
    %291 = vmatprep.subr.bf16.mxu0 0
    %292 = vmatpush1.bf16.msra.mxu0 0
    %293 = vmatprep.subr.bf16.mxu0 0
    %294 = vmatpush1.bf16.msra.mxu0 0
    %295 = vmatprep.subr.bf16.mxu0 0
    %296 = vmatpush1.bf16.msra.mxu0 0
    %297 = vmatprep.subr.bf16.mxu0 0
    %298 = vmatpush1.bf16.msra.mxu0 0
    %299 = vmatprep.subr.bf16.mxu0 0
    %300 = vmatpush1.bf16.msra.mxu0 0
    %301 = vmatprep.subr.bf16.mxu0 0
    %302 = vmatpush1.bf16.msra.mxu0 0
    %303 = vmatprep.subr.bf16.mxu0 0
    %304 = vmatpush1.bf16.msra.mxu0 0
    %305 = vmatprep.subr.bf16.mxu0 0
    %306 = vmatpush1.bf16.msra.mxu0 0
    %307 = vmatprep.subr.bf16.mxu0 0
    %308 = vmatpush1.bf16.msra.mxu0 0
    %309 = vmatprep.mubr.bf16.mxu0 0
    %310 = vmatmul.mubr.bf16.gmra.mrb[0].mxu0 %v275
    %v311 = vpop.f32.mrb[0].mxu0
    %v312 = vadd.f32 0.0, %v311
    %v313 = vpop.f32.mrb[0].mxu0
    %v314 = vpop.f32.mrb[0].mxu0
    %v315 = vpop.f32.mrb[0].mxu0
    %316 = vdwg.mxu0
    %v317 = vadd.f32 %v272, %v312
    %v318 = vtanh.pop %v317
    %v319 = vld [vmem:[#allocation2 + $0x6] sm:$0x3]
    %v320 = vpack.c.bf16 %v318, %v318
    %v322 = vsel %vm114, %v320, 0
    %324 = vmatprep.subr.bf16.mxu0 0
    %325 = vmatpush1.bf16.msra.mxu0 %v176
    %326 = vmatprep.subr.bf16.mxu0 0
    %327 = vmatpush1.bf16.msra.mxu0 %v177
    %328 = vmatprep.subr.bf16.mxu0 0
    %329 = vmatpush1.bf16.msra.mxu0 0
    %330 = vmatprep.subr.bf16.mxu0 0
    %331 = vmatpush1.bf16.msra.mxu0 0
    %332 = vmatprep.subr.bf16.mxu0 0
    %333 = vmatpush1.bf16.msra.mxu0 0
    %334 = vmatprep.subr.bf16.mxu0 0
    %335 = vmatpush1.bf16.msra.mxu0 0
    %336 = vmatprep.subr.bf16.mxu0 0
    %337 = vmatpush1.bf16.msra.mxu0 0
    %338 = vmatprep.subr.bf16.mxu0 0
    %339 = vmatpush1.bf16.msra.mxu0 0
    %340 = vmatprep.subr.bf16.mxu0 0
    %341 = vmatpush1.bf16.msra.mxu0 0
    %342 = vmatprep.subr.bf16.mxu0 0
    %343 = vmatpush1.bf16.msra.mxu0 0
    %344 = vmatprep.subr.bf16.mxu0 0
    %345 = vmatpush1.bf16.msra.mxu0 0
    %346 = vmatprep.subr.bf16.mxu0 0
    %347 = vmatpush1.bf16.msra.mxu0 0
    %348 = vmatprep.subr.bf16.mxu0 0
    %349 = vmatpush1.bf16.msra.mxu0 0
    %350 = vmatprep.subr.bf16.mxu0 0
    %351 = vmatpush1.bf16.msra.mxu0 0
    %352 = vmatprep.subr.bf16.mxu0 0
    %353 = vmatpush1.bf16.msra.mxu0 0
    %354 = vmatprep.subr.bf16.mxu0 0
    %355 = vmatpush1.bf16.msra.mxu0 0
    %356 = vmatprep.mubr.bf16.mxu0 0
    %357 = vmatmul.mubr.bf16.gmra.mrb[0].mxu0 %v322
    %v358 = vpop.f32.mrb[0].mxu0
    %v359 = vadd.f32 0.0, %v358
    %v360 = vpop.f32.mrb[0].mxu0
    %v361 = vpop.f32.mrb[0].mxu0
    %v362 = vpop.f32.mrb[0].mxu0
    %363 = vdwg.mxu0
    %v364 = vadd.f32 %v319, %v359
    %v365 = vtanh.pop %v364
    %v366 = vld [vmem:[#allocation2 + $0x8] sm:$0x3]
    %v367 = vpack.c.bf16 %v365, %v365
    %v369 = vsel %vm114, %v367, 0
    %371 = vmatprep.subr.bf16.mxu0 0
    %372 = vmatpush1.bf16.msra.mxu0 %v176
    %373 = vmatprep.subr.bf16.mxu0 0
    %374 = vmatpush1.bf16.msra.mxu0 %v177
    %375 = vmatprep.subr.bf16.mxu0 0
    %376 = vmatpush1.bf16.msra.mxu0 0
    %377 = vmatprep.subr.bf16.mxu0 0
    %378 = vmatpush1.bf16.msra.mxu0 0
    %379 = vmatprep.subr.bf16.mxu0 0
    %380 = vmatpush1.bf16.msra.mxu0 0
    %381 = vmatprep.subr.bf16.mxu0 0
    %382 = vmatpush1.bf16.msra.mxu0 0
    %383 = vmatprep.subr.bf16.mxu0 0
    %384 = vmatpush1.bf16.msra.mxu0 0
    %385 = vmatprep.subr.bf16.mxu0 0
    %386 = vmatpush1.bf16.msra.mxu0 0
    %387 = vmatprep.subr.bf16.mxu0 0
    %388 = vmatpush1.bf16.msra.mxu0 0
    %389 = vmatprep.subr.bf16.mxu0 0
    %390 = vmatpush1.bf16.msra.mxu0 0
    %391 = vmatprep.subr.bf16.mxu0 0
    %392 = vmatpush1.bf16.msra.mxu0 0
    %393 = vmatprep.subr.bf16.mxu0 0
    %394 = vmatpush1.bf16.msra.mxu0 0
    %395 = vmatprep.subr.bf16.mxu0 0
    %396 = vmatpush1.bf16.msra.mxu0 0
    %397 = vmatprep.subr.bf16.mxu0 0
    %398 = vmatpush1.bf16.msra.mxu0 0
    %399 = vmatprep.subr.bf16.mxu0 0
    %400 = vmatpush1.bf16.msra.mxu0 0
    %401 = vmatprep.subr.bf16.mxu0 0
    %402 = vmatpush1.bf16.msra.mxu0 0
    %403 = vmatprep.mubr.bf16.mxu0 0
    %404 = vmatmul.mubr.bf16.gmra.mrb[0].mxu0 %v369
    %v405 = vpop.f32.mrb[0].mxu0
    %v406 = vadd.f32 0.0, %v405
    %v407 = vpop.f32.mrb[0].mxu0
    %v408 = vpop.f32.mrb[0].mxu0
    %v409 = vpop.f32.mrb[0].mxu0
    %410 = vdwg.mxu0
    %v411 = vadd.f32 %v366, %v406
    %v412 = vtanh.pop %v411
    %v413 = vld [vmem:[#allocation2 + $0xa] sm:$0x3]
    %v414 = vpack.c.bf16 %v412, %v412
    %v416 = vsel %vm114, %v414, 0
    %418 = vmatprep.subr.bf16.mxu0 0
    %419 = vmatpush1.bf16.msra.mxu0 %v176
    %420 = vmatprep.subr.bf16.mxu0 0
    %421 = vmatpush1.bf16.msra.mxu0 %v177
    %422 = vmatprep.subr.bf16.mxu0 0
    %423 = vmatpush1.bf16.msra.mxu0 0
    %424 = vmatprep.subr.bf16.mxu0 0
    %425 = vmatpush1.bf16.msra.mxu0 0
    %426 = vmatprep.subr.bf16.mxu0 0
    %427 = vmatpush1.bf16.msra.mxu0 0
    %428 = vmatprep.subr.bf16.mxu0 0
    %429 = vmatpush1.bf16.msra.mxu0 0
    %430 = vmatprep.subr.bf16.mxu0 0
    %431 = vmatpush1.bf16.msra.mxu0 0
    %432 = vmatprep.subr.bf16.mxu0 0
    %433 = vmatpush1.bf16.msra.mxu0 0
    %434 = vmatprep.subr.bf16.mxu0 0
    %435 = vmatpush1.bf16.msra.mxu0 0
    %436 = vmatprep.subr.bf16.mxu0 0
    %437 = vmatpush1.bf16.msra.mxu0 0
    %438 = vmatprep.subr.bf16.mxu0 0
    %439 = vmatpush1.bf16.msra.mxu0 0
    %440 = vmatprep.subr.bf16.mxu0 0
    %441 = vmatpush1.bf16.msra.mxu0 0
    %442 = vmatprep.subr.bf16.mxu0 0
    %443 = vmatpush1.bf16.msra.mxu0 0
    %444 = vmatprep.subr.bf16.mxu0 0
    %445 = vmatpush1.bf16.msra.mxu0 0
    %446 = vmatprep.subr.bf16.mxu0 0
    %447 = vmatpush1.bf16.msra.mxu0 0
    %448 = vmatprep.subr.bf16.mxu0 0
    %449 = vmatpush1.bf16.msra.mxu0 0
    %450 = vmatprep.mubr.bf16.mxu0 0
    %451 = vmatmul.mubr.bf16.gmra.mrb[0].mxu0 %v416
    %v452 = vpop.f32.mrb[0].mxu0
    %v453 = vadd.f32 0.0, %v452
    %v454 = vpop.f32.mrb[0].mxu0
    %v455 = vpop.f32.mrb[0].mxu0
    %v456 = vpop.f32.mrb[0].mxu0
    %457 = vdwg.mxu0
    %v458 = vadd.f32 %v413, %v453
    %v459 = vtanh.pop %v458
    %v460 = vld [vmem:[#allocation2 + $0xc] sm:$0x3]
    %v461 = vpack.c.bf16 %v459, %v459
    %v463 = vsel %vm114, %v461, 0
    %465 = vmatprep.subr.bf16.mxu0 0
    %466 = vmatpush1.bf16.msra.mxu0 %v176
    %467 = vmatprep.subr.bf16.mxu0 0
    %468 = vmatpush1.bf16.msra.mxu0 %v177
    %469 = vmatprep.subr.bf16.mxu0 0
    %470 = vmatpush1.bf16.msra.mxu0 0
    %471 = vmatprep.subr.bf16.mxu0 0
    %472 = vmatpush1.bf16.msra.mxu0 0
    %473 = vmatprep.subr.bf16.mxu0 0
    %474 = vmatpush1.bf16.msra.mxu0 0
    %475 = vmatprep.subr.bf16.mxu0 0
    %476 = vmatpush1.bf16.msra.mxu0 0
    %477 = vmatprep.subr.bf16.mxu0 0
    %478 = vmatpush1.bf16.msra.mxu0 0
    %479 = vmatprep.subr.bf16.mxu0 0
    %480 = vmatpush1.bf16.msra.mxu0 0
    %481 = vmatprep.subr.bf16.mxu0 0
    %482 = vmatpush1.bf16.msra.mxu0 0
    %483 = vmatprep.subr.bf16.mxu0 0
    %484 = vmatpush1.bf16.msra.mxu0 0
    %485 = vmatprep.subr.bf16.mxu0 0
    %486 = vmatpush1.bf16.msra.mxu0 0
    %487 = vmatprep.subr.bf16.mxu0 0
    %488 = vmatpush1.bf16.msra.mxu0 0
    %489 = vmatprep.subr.bf16.mxu0 0
    %490 = vmatpush1.bf16.msra.mxu0 0
    %491 = vmatprep.subr.bf16.mxu0 0
    %492 = vmatpush1.bf16.msra.mxu0 0
    %493 = vmatprep.subr.bf16.mxu0 0
    %494 = vmatpush1.bf16.msra.mxu0 0
    %495 = vmatprep.subr.bf16.mxu0 0
    %496 = vmatpush1.bf16.msra.mxu0 0
    %497 = vmatprep.mubr.bf16.mxu0 0
    %498 = vmatmul.mubr.bf16.gmra.mrb[0].mxu0 %v463
    %v499 = vpop.f32.mrb[0].mxu0
    %v500 = vadd.f32 0.0, %v499
    %v501 = vpop.f32.mrb[0].mxu0
    %v502 = vpop.f32.mrb[0].mxu0
    %v503 = vpop.f32.mrb[0].mxu0
    %504 = vdwg.mxu0
    %v505 = vadd.f32 %v460, %v500
    %v506 = vtanh.pop %v505
    %v507 = vld [vmem:[#allocation2 + $0xe] sm:$0x3]
    %v508 = vpack.c.bf16 %v506, %v506
    %v510 = vsel %vm114, %v508, 0
    %512 = vmatprep.subr.bf16.mxu0 0
    %513 = vmatpush1.bf16.msra.mxu0 %v176
    %514 = vmatprep.subr.bf16.mxu0 0
    %515 = vmatpush1.bf16.msra.mxu0 %v177
    %516 = vmatprep.subr.bf16.mxu0 0
    %517 = vmatpush1.bf16.msra.mxu0 0
    %518 = vmatprep.subr.bf16.mxu0 0
    %519 = vmatpush1.bf16.msra.mxu0 0
    %520 = vmatprep.subr.bf16.mxu0 0
    %521 = vmatpush1.bf16.msra.mxu0 0
    %522 = vmatprep.subr.bf16.mxu0 0
    %523 = vmatpush1.bf16.msra.mxu0 0
    %524 = vmatprep.subr.bf16.mxu0 0
    %525 = vmatpush1.bf16.msra.mxu0 0
    %526 = vmatprep.subr.bf16.mxu0 0
    %527 = vmatpush1.bf16.msra.mxu0 0
    %528 = vmatprep.subr.bf16.mxu0 0
    %529 = vmatpush1.bf16.msra.mxu0 0
    %530 = vmatprep.subr.bf16.mxu0 0
    %531 = vmatpush1.bf16.msra.mxu0 0
    %532 = vmatprep.subr.bf16.mxu0 0
    %533 = vmatpush1.bf16.msra.mxu0 0
    %534 = vmatprep.subr.bf16.mxu0 0
    %535 = vmatpush1.bf16.msra.mxu0 0
    %536 = vmatprep.subr.bf16.mxu0 0
    %537 = vmatpush1.bf16.msra.mxu0 0
    %538 = vmatprep.subr.bf16.mxu0 0
    %539 = vmatpush1.bf16.msra.mxu0 0
    %540 = vmatprep.subr.bf16.mxu0 0
    %541 = vmatpush1.bf16.msra.mxu0 0
    %542 = vmatprep.subr.bf16.mxu0 0
    %543 = vmatpush1.bf16.msra.mxu0 0
    %544 = vmatprep.mubr.bf16.mxu0 0
    %545 = vmatmul.mubr.bf16.gmra.mrb[0].mxu0 %v510
    %v546 = vpop.f32.mrb[0].mxu0
    %v547 = vadd.f32 0.0, %v546
    %v548 = vpop.f32.mrb[0].mxu0
    %v549 = vpop.f32.mrb[0].mxu0
    %v550 = vpop.f32.mrb[0].mxu0
    %551 = vdwg.mxu0
    %v552 = vadd.f32 %v507, %v547
    %v553 = vtanh.pop %v552
    %vm554 = vcmask 254976
    %555 = vst.msk [vmem:[#allocation12] sm:$0x3] %vm554, %v553
    %v556 = vpack.c.bf16 %v553, %v553
    %v557 = vld [vmem:[%s5] sm:$0xf]
    %v558 = vld [vmem:[%s5 + $0x4] sm:$0xf]
    %v559 = vld [vmem:[%s5 + $0x8] sm:$0xf]
    %v560 = vld [vmem:[%s5 + $0xc] sm:$0xf]
    %v561 = vld [vmem:[%s6] sm:$0x1]
    %v563 = vlaneseq
    %v564 = vshrl.u32 %v563, 7
    %v565 = vsub.s32 0, %v564
    %v566 = vrot.slane %v561, %v565
    %v572 = vunpack.c.l.b16 %v557
    %v573 = vunpack.c.l.b16 %v558
    %v574 = vunpack.c.l.b16 %v559
    %v575 = vunpack.c.l.b16 %v560
    %v576 = vpack.c.b16 %v573, %v572
    %v577 = vpack.c.b16 %v575, %v574
    %v581 = vsel %vm114, %v556, 0
    %583 = vmatprep.subr.bf16.mxu0 0
    %584 = vmatpush1.bf16.msra.mxu0 %v576
    %585 = vmatprep.subr.bf16.mxu0 0
    %586 = vmatpush1.bf16.msra.mxu0 %v577
    %587 = vmatprep.subr.bf16.mxu0 0
    %588 = vmatpush1.bf16.msra.mxu0 0
    %589 = vmatprep.subr.bf16.mxu0 0
    %590 = vmatpush1.bf16.msra.mxu0 0
    %591 = vmatprep.subr.bf16.mxu0 0
    %592 = vmatpush1.bf16.msra.mxu0 0
    %593 = vmatprep.subr.bf16.mxu0 0
    %594 = vmatpush1.bf16.msra.mxu0 0
    %595 = vmatprep.subr.bf16.mxu0 0
    %596 = vmatpush1.bf16.msra.mxu0 0
    %597 = vmatprep.subr.bf16.mxu0 0
    %598 = vmatpush1.bf16.msra.mxu0 0
    %599 = vmatprep.subr.bf16.mxu0 0
    %600 = vmatpush1.bf16.msra.mxu0 0
    %601 = vmatprep.subr.bf16.mxu0 0
    %602 = vmatpush1.bf16.msra.mxu0 0
    %603 = vmatprep.subr.bf16.mxu0 0
    %604 = vmatpush1.bf16.msra.mxu0 0
    %605 = vmatprep.subr.bf16.mxu0 0
    %606 = vmatpush1.bf16.msra.mxu0 0
    %607 = vmatprep.subr.bf16.mxu0 0
    %608 = vmatpush1.bf16.msra.mxu0 0
    %609 = vmatprep.subr.bf16.mxu0 0
    %610 = vmatpush1.bf16.msra.mxu0 0
    %611 = vmatprep.subr.bf16.mxu0 0
    %612 = vmatpush1.bf16.msra.mxu0 0
    %613 = vmatprep.subr.bf16.mxu0 0
    %614 = vmatpush1.bf16.msra.mxu0 0
    %615 = vmatprep.mubr.bf16.mxu0 0
    %616 = vmatmul.mubr.bf16.gmra.mrb[0].mxu0 %v581
    %v617 = vpop.f32.mrb[0].mxu0
    %v618 = vadd.f32 %v566, %v617
    %v619 = vpop.f32.mrb[0].mxu0
    %v620 = vpop.f32.mrb[0].mxu0
    %v621 = vpop.f32.mrb[0].mxu0
    %622 = vdwg.mxu0
    %vm623 = vcmask 1041408
    %v624 = vsel %vm623, %v618, -inf
    %625 = vmax.xlane.f32.xlu0 %v624
    %v626 = vpop.xlane.xlu0 %625
    %v627 = vsub.f32 %v618, %v626
    %v628 = vmul.f32 %v627, 1.442695
    %v629 = vpow.pop %v628
    %v630 = vsel %vm623, %v629, 0.0
    %631 = vadd.xlane.f32.xlu0 %v630
    %v632 = vpop.xlane.xlu0 %631
    %v633 = vlog2.pop %v632
    %v634 = vmul.f32 %v633, 0.6931472
    %v635 = vadd.f32 %v634, %v626
    %v636 = vsub.f32 %v618, %v635
    %637 = vst [vmem:[#allocation11] sm:$0x3] %v636
    // Predicated region
    $region46: #{tpu_custom_call.1} parent=1 // pred_check
      _
    $region47: #{tpu_custom_call.1} parent=1 // pred_check_branch
      %639 = sbr.rel (0) target = $region49
    $region48: #{tpu_custom_call.1} parent=1 // pred_region
      %s641 = ssub.s32 32, 32
      %642 = vsyncadd [#allocation5], %s641
      %s644 = sshll.u32 [#allocation11], 4
      %s645 = int_to_ptr.vmem [resolvable:$true] %s644
      %647 = dma.vmem_to_hbm [thread:$0]  %s645, 32, %s7, [#allocation5]
    $region49: #{tpu_custom_call.1} parent=1 // pred_fallthru
      _
    // Predicated region
    $region50: #{tpu_custom_call.1} parent=1 // pred_check
      _
    $region51: #{tpu_custom_call.1} parent=1 // pred_check_branch
      %649 = sbr.rel (0) target = $region53
    $region52: #{tpu_custom_call.1} parent=1 // pred_region
      %s651 = ssub.s32 32, 32
      %652 = vsyncadd [#allocation13], %s651
      %s654 = sshll.u32 [#allocation12], 4
      %s655 = int_to_ptr.vmem [resolvable:$true] %s654
      %657 = dma.vmem_to_hbm [thread:$0]  %s655, 32, %s8, [#allocation13]
    $region53: #{tpu_custom_call.1} parent=1 // pred_fallthru
      _
    // Predicated region
    $region54: #{tpu_custom_call.1} parent=1 // pred_check
      _
    $region55: #{tpu_custom_call.1} parent=1 // pred_check_branch
      %659 = sbr.rel (0) target = $region57
    $region56: #{tpu_custom_call.1} parent=1 // pred_region
      %660 = dma.done [#allocation5], 32
    $region57: #{tpu_custom_call.1} parent=1 // pred_fallthru
      _
    // Predicated region
    $region58: #{tpu_custom_call.1} parent=1 // pred_check
      _
    $region59: #{tpu_custom_call.1} parent=1 // pred_check_branch
      %662 = sbr.rel (0) target = $region61
    $region60: #{tpu_custom_call.1} parent=1 // pred_region
      %663 = dma.done [#allocation13], 32
    $region61: #{tpu_custom_call.1} parent=1 // pred_fallthru
      _
    %664 = vsyncpa [#allocation4], 1
    %665 = vsyncpa [#allocation7], 1
    %666 = vsyncpa [#allocation10], 1
    %667 = vsyncpa [#allocation5], 1
    %668 = vsyncpa [#allocation13], 1

</llo_original>
